<compile_context>
chip_gen: v7x
topology: tpu7x:2x2x1
jax: 0.10.0
libtpu: 0.0.40
codegen_flags: <defaults>
</compile_context>

<pallas_src>
import functools

import jax
import jax.numpy as jnp
from jax.experimental import pallas as pl
from jax.experimental.pallas import tpu as pltpu


_CLS_CHUNK = 1024  # bound on the (TB, cls_chunk) one-hot intermediate


def _round_up(x: int, m: int) -> int:
    return (x + m - 1) // m * m


def _pick_tb(batch: int, emb_dim: int) -> int:
    """Batch tile size: multiple of 8, v7x-aware, >=2 tiles when possible."""
    b8 = _round_up(batch, 8)
    # Output is double-buffered (2*TB*emb_dim*itemsize); cap TB for wide
    # embeddings so it fits v7x's 64 MiB per-TC VMEM with headroom.
    cap = 256 if emb_dim >= 2048 else 512
    if b8 <= cap:
        # Split into two tiles when possible so megacore (v7x) can shard the
        # "parallel" batch axis; tiles remain multiples of 8.
        if b8 >= 128 and b8 % 16 == 0:
            return b8 // 2
        return b8
    # Large batch: prefer a divisor of b8 (zero padding waste), otherwise fall
    # back to 128 (waste < 128 rows, num_tiles >= 2 either way).
    for tb in (cap, 256, 128, 64):
        if b8 % tb == 0:
            return tb
    return 128


def _class_embed_kernel(idx_ref, tbl_ref, out_ref, *, cls_chunk):
    # idx_ref : (TB, 1) int32 in VMEM -- keep mask already folded in as an
    #           out-of-range sentinel (== cls_dim) for dropped / padded rows.
    # tbl_ref : (cls_dim, emb_dim) resident table block (single buffer).
    # out_ref : (TB, emb_dim)
    tb = idx_ref.shape[0]
    cls_dim = tbl_ref.shape[0]
    idx = idx_ref[...]                                            # (TB, 1)

    def chunk_dot(c0, csz, full):
        classes = jax.lax.broadcasted_iota(jnp.int32, (tb, csz), 1) + c0
        # 0/1 is exact in bf16/f32: build the one-hot directly in the table's
        # dtype so the MXU sees matching operand dtypes; accumulate in f32.
        one_hot = (classes == idx).astype(tbl_ref.dtype)
        rhs = tbl_ref[...] if full else tbl_ref[pl.ds(c0, csz), :]
        return jnp.dot(one_hot, rhs, preferred_element_type=jnp.float32)

    if cls_dim <= cls_chunk:
        out_ref[...] = chunk_dot(0, cls_dim, True).astype(out_ref.dtype)
    else:
        # Static (trace-time) chunking keeps the one-hot intermediate bounded
        # at TB*cls_chunk elements regardless of cls_dim.
        acc = chunk_dot(0, cls_chunk, False)
        for c0 in range(cls_chunk, cls_dim, cls_chunk):
            acc = acc + chunk_dot(c0, min(cls_chunk, cls_dim - c0), False)
        out_ref[...] = acc.astype(out_ref.dtype)


def class_embedder_forward(idx, keep_mask, table):
    """Embedding lookup + batch drop.

    idx       : (B,)   integer class indices
    keep_mask : (B,)   0/1 (nonzero = keep embedding, 0 = zero it)
    table     : (cls_dim, emb_dim) embedding weight
    returns   : (B, emb_dim) in table.dtype
    """
    B = idx.shape[0]
    cls_dim, emb_dim = table.shape
    itemsize = jnp.dtype(table.dtype).itemsize

    # Fold the batch-drop gate into the index with an out-of-range sentinel:
    # dropped rows match no class -> all-zero one-hot row -> zero embedding.
    idx_eff = jnp.where(keep_mask.astype(jnp.int32) != 0,
                        idx.astype(jnp.int32), cls_dim)

    TB = _pick_tb(B, emb_dim)
    B_pad = _round_up(B, TB)
    num_tiles = B_pad // TB

    # Padded rows also get the sentinel (zero rows, sliced off below).
    idx_p = jnp.full((B_pad, 1), cls_dim, jnp.int32).at[:B, 0].set(idx_eff)

    # Explicit scoped-VMEM budget: table (1 buffer, Buffered(1)) + output
    # (double-buffered) + idx (double-buffered, lane-padded) + in-kernel
    # intermediates (one-hot chunk + f32 accumulator), with headroom.  Capped
    # below v7x's 64 MiB per-TC physical VMEM.
    tbl_bytes = cls_dim * emb_dim * itemsize
    out_bytes = 2 * TB * emb_dim * itemsize
    idx_bytes = 2 * TB * 128 * 4
    inter_bytes = TB * min(cls_dim, _CLS_CHUNK) * 4 + TB * emb_dim * 4
    vmem_limit = int(1.25 * (tbl_bytes + out_bytes + idx_bytes + inter_bytes))
    vmem_limit = min(max(vmem_limit + (4 << 20), 16 << 20), 56 << 20)

    cost = pl.CostEstimate(
        flops=2 * B_pad * cls_dim * emb_dim,
        transcendentals=0,
        bytes_accessed=tbl_bytes + B_pad * emb_dim * itemsize + B_pad * 4,
    )

    grid_spec = pl.GridSpec(
        grid=(num_tiles,),
        in_specs=[
            pl.BlockSpec((TB, 1), lambda i: (i, 0)),
            # Constant index_map + single buffer -> table is DMA'd once and
            # stays resident (no double-buffer copy of the whole table).
            pl.BlockSpec((cls_dim, emb_dim), lambda i: (0, 0),
                         pipeline_mode=pl.Buffered(1)),
        ],
        out_specs=pl.BlockSpec((TB, emb_dim), lambda i: (i, 0)),
    )

    out = pl.pallas_call(
        functools.partial(_class_embed_kernel, cls_chunk=_CLS_CHUNK),
        out_shape=jax.ShapeDtypeStruct((B_pad, emb_dim), table.dtype),
        grid_spec=grid_spec,
        compiler_params=pltpu.CompilerParams(
            dimension_semantics=("parallel",),
            vmem_limit_bytes=vmem_limit,
        ),
        cost_estimate=cost,
    )(idx_p, table)

    return out[:B] if B_pad != B else out


if __name__ == "__main__":
    # Small shapes consistent with ClassEmbedder(emb_dim, cls_dim, p_dropb)
    B = 8
    emb_dim = 128
    cls_dim = 16
    p_dropb = 0.1

    key = jax.random.PRNGKey(0)
    k_tbl, k_idx, k_drop = jax.random.split(key, 3)

    # nn.Embedding default init: N(0, 1)
    table = jax.random.normal(k_tbl, (cls_dim, emb_dim), dtype=jnp.float32)
    idx = jax.random.randint(k_idx, (B,), 0, cls_dim, dtype=jnp.int32)
    # Per-sample keep mask (1 = keep embedding, 0 = drop / zero it)
    keep_mask = (jax.random.uniform(k_drop, (B,)) >= p_dropb).astype(jnp.int32)

    out = class_embedder_forward(idx, keep_mask, table)
    out = jax.block_until_ready(out)

    # Pure-JAX reference check
    ref = table[idx] * keep_mask[:, None].astype(jnp.float32)
    assert out.shape == (B, emb_dim)
    assert jnp.allclose(out, ref, atol=1e-5), "mismatch vs reference"

    print("KERNEL_OK")
</pallas_src>

<mosaic_0001>
module attributes {stable_mosaic.version = 11 : i64} {
  func.func @_class_embed_kernel(%arg0: i32, %arg1: memref<8x1xi32, #tpu.memory_space<vmem>>, %arg2: memref<16x128xf32, #tpu.memory_space<vmem>>, %arg3: memref<8x128xf32, #tpu.memory_space<vmem>>) attributes {dimension_semantics = [#tpu.dimension_semantics<parallel>], iteration_bounds = array<i64: 1>, scalar_prefetch = 0 : i64, scratch_operands = 0 : i64, tpu.core_type = #tpu.core_type<tc>, window_params = [{transform_indices = @transform_0, window_bounds = array<i64: 8, 1>}, {pipeline_mode = #tpu.pipeline_mode<synchronous>, transform_indices = @transform_1, window_bounds = array<i64: 16, 128>}, {transform_indices = @transform_2, window_bounds = array<i64: 8, 128>}]} {
    %c0 = arith.constant 0 : index
    %c0_0 = arith.constant 0 : index
    %0 = vector.load %arg1[%c0, %c0_0] : memref<8x1xi32, #tpu.memory_space<vmem>>, vector<8x1xi32>
    %1 = tpu.iota {dimensions = array<i32: 1>} : vector<8x16xi32>
    %c0_i32 = arith.constant 0 : i32
    %2 = vector.broadcast %c0_i32 : i32 to vector<8x16xi32>
    %3 = arith.addi %1, %2 : vector<8x16xi32>
    %4 = vector.broadcast %0 : vector<8x1xi32> to vector<8x16xi32>
    %5 = arith.cmpi eq, %3, %4 : vector<8x16xi32>
    %6 = arith.extui %5 : vector<8x16xi1> to vector<8x16xi32>
    %7 = arith.sitofp %6 : vector<8x16xi32> to vector<8x16xf32>
    %c0_1 = arith.constant 0 : index
    %c0_2 = arith.constant 0 : index
    %8 = vector.load %arg2[%c0_1, %c0_2] : memref<16x128xf32, #tpu.memory_space<vmem>>, vector<16x128xf32>
    %cst = arith.constant dense<0.000000e+00> : vector<8x128xf32>
    %9 = tpu.matmul %7, %8, %cst {dimension_numbers = #tpu.dot_dimension_numbers<[1], [0], [0], [1], [0, 0, 1, 1], [], []>} : vector<8x16xf32>, vector<16x128xf32>, vector<8x128xf32> -> vector<8x128xf32>
    %c0_3 = arith.constant 0 : index
    %c0_4 = arith.constant 0 : index
    %10 = vector.load %arg3[%c0_3, %c0_4] : memref<8x128xf32, #tpu.memory_space<vmem>>, vector<8x128xf32>
    tpu.vector_store %arg3[%c0_3, %c0_4], %9 {strides = array<i32>} : memref<8x128xf32, #tpu.memory_space<vmem>>, vector<8x128xf32>,
    return
  }
  func.func @transform_0(%arg0: i32) -> (i32, i32) {
    %c0_i32 = arith.constant 0 : i32
    %c0_i32_0 = arith.constant 0 : i32
    return %arg0, %c0_i32 : i32, i32
  }
  func.func @transform_1(%arg0: i32) -> (i32, i32) {
    %c0_i32 = arith.constant 0 : i32
    %c0_i32_0 = arith.constant 0 : i32
    %c0_i32_1 = arith.constant 0 : i32
    return %c0_i32, %c0_i32_0 : i32, i32
  }
  func.func @transform_2(%arg0: i32) -> (i32, i32) {
    %c0_i32 = arith.constant 0 : i32
    %c0_i32_0 = arith.constant 0 : i32
    return %arg0, %c0_i32 : i32, i32
  }
}

</mosaic_0001>

<llo_original>
// kernel: tpu_custom_call.1
$region0: #{tpu_custom_call.1}
  #allocation0 [shape = 'u32[]', space=smem, size = 0x4, offset = 0x4, fixed_abs, tag = 'smem constant byte address 0x4 - core index']
  #allocation1 [shape = 'u32[144,128]{1,0:T(1,128)}', space=vmem, size = 0x12000, scoped, tag = 'internal scratch']
  %s0 = inlined_call_operand.vmem [shape: s32[8,1], index: 0, kind: input, shape index: {}]
  %s1 = inlined_call_operand.hbm [shape: f32[16,128], index: 1, kind: input, shape index: {}]
  %s2 = inlined_call_operand.hbm [shape: f32[8,128], index: 2, kind: output, shape index: {}]
  %s3 = sld [smem:[#allocation0]]
  $region22: #{tpu_custom_call.1} parent=0
    _
  %s5 = ssub.s32 1, %s3
  %s6 = scalar_select 0, %s5, %s3
  $region1: #{tpu_custom_call.1} parent=0
    #allocation2 [shape = 'u8[8192]{0}', space=vmem, size = 0x2000, scoped, tag = 'input window, operand 1, single buffered']
    #allocation3 [shape = 's32[1]{0}', space=sflag, size = 0x4, scoped, tag = 'scoped memory for tpu_custom_call.1']
    #allocation4 [shape = 's32[1]{0}', space=sflag, size = 0x4, scoped, tag = 'scoped memory for tpu_custom_call.1']
    #allocation5 [shape = 'u8[4096]{0}', space=vmem, size = 0x1000, scoped, tag = 'output window, operand 0, single buffered']
    %7 = vsyncpa [#allocation3], 0
    %8 = vsyncpa [#allocation4], 0
    // Predicated region
    $region2: #{tpu_custom_call.1} parent=1 // pred_check
      _
    $region3: #{tpu_custom_call.1} parent=1 // pred_check_branch
      %10 = sbr.rel (0) target = $region5
    $region4: #{tpu_custom_call.1} parent=1 // pred_region
      _
    $region5: #{tpu_custom_call.1} parent=1 // pred_fallthru
      _
    // Predicated region
    $region6: #{tpu_custom_call.1} parent=1 // pred_check
      _
    $region7: #{tpu_custom_call.1} parent=1 // pred_check_branch
      %12 = sbr.rel (0) target = $region9
    $region8: #{tpu_custom_call.1} parent=1 // pred_region
      %s14 = ssub.s32 256, 256
      %15 = vsyncadd [#allocation3], %s14
      %s16 = sshll.u32 [#allocation2], 4
      %s17 = int_to_ptr.vmem [resolvable:$true] %s16
      %22 = dma.hbm_to_vmem [thread:$0]  %s1, 256, %s17, [#allocation3], 128, 128, 8
    $region9: #{tpu_custom_call.1} parent=1 // pred_fallthru
      _
    // Predicated region
    $region10: #{tpu_custom_call.1} parent=1 // pred_check
      _
    $region11: #{tpu_custom_call.1} parent=1 // pred_check_branch
      %24 = sbr.rel (0) target = $region13
    $region12: #{tpu_custom_call.1} parent=1 // pred_region
      %25 = dma.done [#allocation3], 256
    $region13: #{tpu_custom_call.1} parent=1 // pred_fallthru
      _
    %v26 = vld [vmem:[%s0] sm:$0xff]
    %v27 = vlaneseq
    %v28 = vand.u32 %v27, 127
    %29 = vset.pattern.permute.xlu0 0
    %30 = vperm.xlu0 %29, %v26
    %v31 = vpop.permute.xlu0 %30
    %vm32 = vcmp.eq.s32.totalorder %v28, %v31
    %v33 = vsel %vm32, 1, 0
    %v34 = vcvt.s32.f32 %v33
    %v35 = vld [vmem:[#allocation2] sm:$0xff]
    %v36 = vld [vmem:[#allocation2 + $0x8] sm:$0xff]
    %vm37 = vcmask 130048
    %v39 = vsel %vm37, %v34, 0
    %41 = vmatprep.subr.mxu0 0.0
    %42 = vmatpush1.msra.mxu0 %v35
    %43 = vmatprep.subr.mxu0 0.0
    %44 = vmatpush1.msra.mxu0 %v36
    %45 = vmatprep.subr.mxu0 0.0
    %46 = vmatpush1.msra.mxu0 0.0
    %47 = vmatprep.subr.mxu0 0.0
    %48 = vmatpush1.msra.mxu0 0.0
    %49 = vmatprep.subr.mxu0 0.0
    %50 = vmatpush1.msra.mxu0 0.0
    %51 = vmatprep.subr.mxu0 0.0
    %52 = vmatpush1.msra.mxu0 0.0
    %53 = vmatprep.subr.mxu0 0.0
    %54 = vmatpush1.msra.mxu0 0.0
    %55 = vmatprep.subr.mxu0 0.0
    %56 = vmatpush1.msra.mxu0 0.0
    %57 = vmatprep.subr.mxu0 0.0
    %58 = vmatpush1.msra.mxu0 0.0
    %59 = vmatprep.subr.mxu0 0.0
    %60 = vmatpush1.msra.mxu0 0.0
    %61 = vmatprep.subr.mxu0 0.0
    %62 = vmatpush1.msra.mxu0 0.0
    %63 = vmatprep.subr.mxu0 0.0
    %64 = vmatpush1.msra.mxu0 0.0
    %65 = vmatprep.subr.mxu0 0.0
    %66 = vmatpush1.msra.mxu0 0.0
    %67 = vmatprep.subr.mxu0 0.0
    %68 = vmatpush1.msra.mxu0 0.0
    %69 = vmatprep.subr.mxu0 0.0
    %70 = vmatpush1.msra.mxu0 0.0
    %71 = vmatprep.subr.mxu0 0.0
    %72 = vmatpush1.msra.mxu0 0.0
    %73 = vmatprep.subr.mxu0 0.0
    %74 = vmatpush1.msra.mxu0 0.0
    %75 = vmatprep.subr.mxu0 0.0
    %76 = vmatpush1.msra.mxu0 0.0
    %77 = vmatprep.subr.mxu0 0.0
    %78 = vmatpush1.msra.mxu0 0.0
    %79 = vmatprep.subr.mxu0 0.0
    %80 = vmatpush1.msra.mxu0 0.0
    %81 = vmatprep.subr.mxu0 0.0
    %82 = vmatpush1.msra.mxu0 0.0
    %83 = vmatprep.subr.mxu0 0.0
    %84 = vmatpush1.msra.mxu0 0.0
    %85 = vmatprep.subr.mxu0 0.0
    %86 = vmatpush1.msra.mxu0 0.0
    %87 = vmatprep.subr.mxu0 0.0
    %88 = vmatpush1.msra.mxu0 0.0
    %89 = vmatprep.subr.mxu0 0.0
    %90 = vmatpush1.msra.mxu0 0.0
    %91 = vmatprep.subr.mxu0 0.0
    %92 = vmatpush1.msra.mxu0 0.0
    %93 = vmatprep.subr.mxu0 0.0
    %94 = vmatpush1.msra.mxu0 0.0
    %95 = vmatprep.subr.mxu0 0.0
    %96 = vmatpush1.msra.mxu0 0.0
    %97 = vmatprep.subr.mxu0 0.0
    %98 = vmatpush1.msra.mxu0 0.0
    %99 = vmatprep.subr.mxu0 0.0
    %100 = vmatpush1.msra.mxu0 0.0
    %101 = vmatprep.subr.mxu0 0.0
    %102 = vmatpush1.msra.mxu0 0.0
    %103 = vmatprep.subr.mxu0 0.0
    %104 = vmatpush1.msra.mxu0 0.0
    %105 = vmatprep.mubr.f32.mxu0 0.0
    %106 = vmatmul.mubr.f32.gmra.mrb[0].mxu0 %v39
    %v107 = vpop.f32.mrb[0].mxu0
    %v108 = vadd.f32 0.0, %v107
    %v109 = vpop.f32.mrb[0].mxu0
    %110 = vdwg.mxu0
    %111 = vst [vmem:[#allocation5] sm:$0xff] %v108
    // Predicated region
    $region14: #{tpu_custom_call.1} parent=1 // pred_check
      _
    $region15: #{tpu_custom_call.1} parent=1 // pred_check_branch
      %113 = sbr.rel (0) target = $region17
    $region16: #{tpu_custom_call.1} parent=1 // pred_region
      %s115 = ssub.s32 128, 128
      %116 = vsyncadd [#allocation4], %s115
      %s118 = sshll.u32 [#allocation5], 4
      %s119 = int_to_ptr.vmem [resolvable:$true] %s118
      %121 = dma.vmem_to_hbm [thread:$0]  %s119, 128, %s2, [#allocation4]
    $region17: #{tpu_custom_call.1} parent=1 // pred_fallthru
      _
    // Predicated region
    $region18: #{tpu_custom_call.1} parent=1 // pred_check
      _
    $region19: #{tpu_custom_call.1} parent=1 // pred_check_branch
      %123 = sbr.rel (0) target = $region21
    $region20: #{tpu_custom_call.1} parent=1 // pred_region
      %124 = dma.done [#allocation4], 128
    $region21: #{tpu_custom_call.1} parent=1 // pred_fallthru
      _
    %125 = vsyncpa [#allocation3], 1
    %126 = vsyncpa [#allocation4], 1

</llo_original>
